<compile_context>
chip_gen: v7x
topology: tpu7x:2x2x1
jax: 0.10.0
libtpu: 0.0.40
codegen_flags: <defaults>
</compile_context>

<pallas_src>
import jax
import jax.numpy as jnp
from jax.experimental import pallas as pl
from jax.experimental.pallas import tpu as pltpu


def _upscale_kernel(x_ref, o_ref):
    # x_ref: (rows_tile, 1, HW) ; o_ref: (rows_tile, d_chunk, HW)
    # Sublane-axis broadcast only -- a pure vreg-level move, no reshape.
    o_ref[...] = jnp.broadcast_to(x_ref[...], o_ref.shape)


def _sublane_multiple(itemsize):
    # Native second-to-last tile: 8 rows of 32-bit; narrower dtypes pack
    # 2x / 4x rows per sublane (16 for bf16, 32 for int8/fp8).
    return max(8, 32 // int(itemsize))


def _physical_vmem_bytes():
    """Best-effort query of per-core physical VMEM; None if unknown."""
    try:
        info = pltpu.get_tpu_info()
        for name in ("vmem_capacity_bytes", "vmem_bytes", "vmem_size_bytes"):
            v = getattr(info, name, None)
            if v:
                return int(v)
    except Exception:
        pass
    return None


def _generation_budgets():
    """Return (out_block_budget_bytes, vmem_limit_cap_bytes)."""
    phys = _physical_vmem_bytes()
    if phys is not None and phys <= (64 << 20):
        # v7x-class: only 64 MiB physical VMEM per TensorCore, but 3.2 TB/s
        # HBM -> large blocks, tight scoped limit.
        return (16 << 20), (48 << 20)
    if phys is not None:
        # v5e / v6e: 128 MiB physical VMEM.
        return (20 << 20), (88 << 20)
    # Unknown chip: budget/limit that is safe on every generation (incl. v7x).
    return (16 << 20), (48 << 20)


def _choose_tiles(rows, dim_size, hw, itemsize, out_block_budget):
    """Pick (rows_tile, d_chunk). No divisibility requirements: the grid uses
    cdiv and Pallas handles the ragged last block."""
    bytes_per_d_row = max(1, hw * itemsize)
    sub = _sublane_multiple(itemsize)

    # Prefer covering the whole new dimension in one block (full array dim is
    # always layout-legal on the second-to-last axis).
    if dim_size * bytes_per_d_row <= out_block_budget:
        d_chunk = dim_size
    else:
        # Bounded chunk: a multiple of the dtype-aware sublane tile that fits
        # the budget (never falls back to the full, over-budget dimension).
        cap = max(1, out_block_budget // bytes_per_d_row)
        d_chunk = max(sub, (cap // sub) * sub)
        d_chunk = min(d_chunk, dim_size) if dim_size >= sub else dim_size
        if d_chunk % sub != 0 and d_chunk != dim_size:
            d_chunk = sub

    # Budget the output block AND the matching input block ((d_chunk + 1)
    # rows of hw elements per outer row) so double-buffering stays in VMEM.
    rows_cap = max(1, out_block_budget // ((d_chunk + 1) * bytes_per_d_row))
    rows_tile = max(1, min(rows, rows_cap))

    # Guarantee >= 2 grid steps (v7x has 2 TensorCores; a (1,1) grid would
    # leave one idle). Splitting rows is always legal (no layout constraint).
    if pl.cdiv(rows, rows_tile) * pl.cdiv(dim_size, d_chunk) < 2 and rows >= 2:
        rows_tile = pl.cdiv(rows, 2)

    return rows_tile, d_chunk


def dimension_upscale(x, dim_size, dim=2):
    """Equivalent of x.unsqueeze(dim).expand(*x.shape[:dim], dim_size,
    *x.shape[dim:]) for arbitrary-rank input."""
    assert 0 <= dim <= x.ndim, "dim out of range"
    lead = x.shape[:dim]
    trail = x.shape[dim:]

    rows = 1
    for s in lead:
        rows *= int(s)
    hw = 1
    for s in trail:
        hw *= int(s)

    # Free, contiguous reshape in the wrapper: lane-dense trailing axis.
    x2 = x.reshape(rows, 1, hw)

    itemsize = jnp.dtype(x.dtype).itemsize
    out_block_budget, vmem_cap = _generation_budgets()
    rows_tile, d_chunk = _choose_tiles(rows, dim_size, hw, itemsize,
                                       out_block_budget)

    grid = (pl.cdiv(rows, rows_tile), pl.cdiv(dim_size, d_chunk))

    out_block_bytes = rows_tile * d_chunk * hw * itemsize
    in_block_bytes = rows_tile * 1 * hw * itemsize
    # Double-buffered in + out blocks, plus a little slack for internal
    # scratch; clamp to a generation-safe cap (well under v7x's 64 MiB).
    vmem_limit = min(vmem_cap,
                     max(32 << 20,
                         2 * (out_block_bytes + in_block_bytes) + (4 << 20)))

    in_bytes = rows * hw * itemsize
    out_bytes = rows * dim_size * hw * itemsize

    out = pl.pallas_call(
        _upscale_kernel,
        out_shape=jax.ShapeDtypeStruct((rows, dim_size, hw), x.dtype),
        grid_spec=pltpu.PrefetchScalarGridSpec(
            num_scalar_prefetch=0,
            grid=grid,
            in_specs=[
                # Input block index is independent of d (the fastest grid
                # axis) -> Pallas skips re-fetching it across d steps.
                pl.BlockSpec((rows_tile, 1, hw), lambda r, d: (r, 0, 0)),
            ],
            out_specs=pl.BlockSpec(
                (rows_tile, d_chunk, hw), lambda r, d: (r, d, 0)
            ),
        ),
        compiler_params=pltpu.CompilerParams(
            # Every (r, d) step writes a distinct output block -> fully
            # parallel grid (v7x shards it across its two TensorCores).
            dimension_semantics=("parallel", "parallel"),
            vmem_limit_bytes=vmem_limit,
        ),
        cost_estimate=pl.CostEstimate(
            flops=0, transcendentals=0, bytes_accessed=in_bytes + out_bytes
        ),
    )(x2)

    return out.reshape(*lead, dim_size, *trail)


if __name__ == "__main__":
    key = jax.random.PRNGKey(0)
    B, C, H, W = 2, 4, 16, 16
    dim_size = 8  # constructor arg of DimensionUpscale
    dim = 2

    x = jax.random.normal(key, (B, C, H, W), dtype=jnp.float32)

    out = dimension_upscale(x, dim_size=dim_size, dim=dim)
    out = jax.block_until_ready(out)

    # Reference: unsqueeze(dim=2) + expand
    ref = jnp.broadcast_to(x[:, :, None, :, :], (B, C, dim_size, H, W))

    assert out.shape == (B, C, dim_size, H, W), out.shape
    assert out.dtype == x.dtype, out.dtype
    assert jnp.array_equal(out, ref), "mismatch vs broadcast reference"

    print("KERNEL_OK")
</pallas_src>

<mosaic_0001>
module attributes {stable_mosaic.version = 11 : i64} {
  func.func @_upscale_kernel(%arg0: i32, %arg1: i32, %arg2: memref<4x1x256xf32, #tpu.memory_space<vmem>>, %arg3: memref<4x8x256xf32, #tpu.memory_space<vmem>>) attributes {dimension_semantics = [#tpu.dimension_semantics<parallel>, #tpu.dimension_semantics<parallel>], iteration_bounds = array<i64: 2, 1>, scalar_prefetch = 0 : i64, scratch_operands = 0 : i64, tpu.core_type = #tpu.core_type<tc>, window_params = [{transform_indices = @transform_0, window_bounds = array<i64: 4, 1, 256>}, {transform_indices = @transform_1, window_bounds = array<i64: 4, 8, 256>}]} {
    %c0 = arith.constant 0 : index
    %c0_0 = arith.constant 0 : index
    %c0_1 = arith.constant 0 : index
    %0 = vector.load %arg2[%c0, %c0_0, %c0_1] : memref<4x1x256xf32, #tpu.memory_space<vmem>>, vector<4x1x256xf32>
    %1 = vector.shape_cast %0 : vector<4x1x256xf32> to vector<4x1x256xf32>
    %2 = vector.broadcast %1 : vector<4x1x256xf32> to vector<4x8x256xf32>
    %c0_2 = arith.constant 0 : index
    %c0_3 = arith.constant 0 : index
    %c0_4 = arith.constant 0 : index
    %3 = vector.load %arg3[%c0_2, %c0_3, %c0_4] : memref<4x8x256xf32, #tpu.memory_space<vmem>>, vector<4x8x256xf32>
    tpu.vector_store %arg3[%c0_2, %c0_3, %c0_4], %2 {strides = array<i32>} : memref<4x8x256xf32, #tpu.memory_space<vmem>>, vector<4x8x256xf32>,
    return
  }
  func.func @transform_0(%arg0: i32, %arg1: i32) -> (i32, i32, i32) {
    %c0_i32 = arith.constant 0 : i32
    %c0_i32_0 = arith.constant 0 : i32
    %c0_i32_1 = arith.constant 0 : i32
    return %arg0, %c0_i32, %c0_i32_0 : i32, i32, i32
  }
  func.func @transform_1(%arg0: i32, %arg1: i32) -> (i32, i32, i32) {
    %c0_i32 = arith.constant 0 : i32
    %c0_i32_0 = arith.constant 0 : i32
    return %arg0, %arg1, %c0_i32 : i32, i32, i32
  }
}

</mosaic_0001>

<llo_original>
// kernel: tpu_custom_call.1
$region0: #{tpu_custom_call.1}
  #allocation0 [shape = 'u32[]', space=smem, size = 0x4, offset = 0x4, fixed_abs, tag = 'smem constant byte address 0x4 - core index']
  #allocation1 [shape = 'u32[144,128]{1,0:T(1,128)}', space=vmem, size = 0x12000, scoped, tag = 'internal scratch']
  %s0 = inlined_call_operand.hbm [shape: f32[8,1,256], index: 0, kind: input, shape index: {}]
  %s1 = inlined_call_operand.hbm [shape: f32[8,8,256], index: 1, kind: output, shape index: {}]
  %s2 = sld [smem:[#allocation0]]
  $region41: #{tpu_custom_call.1} parent=0
    _
  %s4 = ssub.s32 1, %s2
  %s5 = scalar_select 0, %s4, %s2
  $region1: #{tpu_custom_call.1} parent=0
    #allocation2 [shape = 'u8[8192]{0}', space=vmem, size = 0x2000, scoped, tag = 'input window, operand 0']
    #allocation3 [shape = 's32[2]{0}', space=sflag, size = 0x8, scoped, tag = 'scoped memory for tpu_custom_call.1']
    #allocation4 [shape = 's32[2]{0}', space=sflag, size = 0x8, scoped, tag = 'scoped memory for tpu_custom_call.1']
    #allocation5 [shape = 'u8[65536]{0}', space=vmem, size = 0x10000, scoped, tag = 'output window, operand 0']
    %6 = vsyncpa [#allocation3], 0
    %s7 = scalar_lea.sflag [#allocation3], 1
    %8 = vsyncpa %s7, 0
    %9 = vsyncpa [#allocation4], 0
    %s10 = scalar_lea.sflag [#allocation4], 1
    %11 = vsyncpa %s10, 0
    loop: start=0, step=1, limit=4
    $region2: #{tpu_custom_call.1} parent=1 // loop_pre_header
      _
    $region3: #{tpu_custom_call.1} parent=1 // loop_header
      %s13 = sphi 0, %s17
      %p14 = scmp.ge.s32.totalorder %s13, 4
      %s20 = sphi 0, %s32
      %s21 = sphi 0, %s28
      %s22 = sphi 0, %s20
      %s23 = sphi 0, %s21
      %s24 = sphi 0, %s22
      %s25 = sphi 0, %s23
      %s35 = sphi 0, %s37
      %s38 = sphi 0, %s35
      %s39 = sphi 0, %s38
      %s55 = sphi 0, %s39
      %s63 = sphi 0, %s65
      %s66 = sphi 0, %s63
      %s67 = sphi 0, %s66
      %s83 = sphi 0, %s67
    $region4: #{tpu_custom_call.1} parent=1 // loop_header_branch
      %16 = sbr.rel (%p14) target = $region8
    $region5: #{tpu_custom_call.1} parent=1 // loop_body
      %s18 = ssub.s32 %s13, 1
      %s19 = ssub.s32 %s13, 2
      %s26 = sadd.s32 1, %s21
      %p27 = scmp.ge.s32.totalorder %s26, 1
      %s28 = scalar_select %p27, 0, %s26
      %s29 = sadd.s32 1, %s20
      %s30 = scalar_select %p27, %s29, %s20
      %p31 = scmp.ge.s32.totalorder %s30, 2
      %s32 = scalar_select %p31, 0, %s30
      %s33 = ssub.s32 %s20, %s32
      %p34 = scmp.eq.s32.totalorder %s33, 0
      %s36 = sadd.s32 %s35, 1
      %s37 = scalar_select %p34, %s35, %s36
      %p40 = pneg %p34
      %p41 = scmp.eq.s32.totalorder %s13, 1
      %p42 = por %p40, %p41
      %p43 = scmp.ne.s32.totalorder %s35, %s38
      %p44 = scmp.eq.s32.totalorder %s13, 0
      %p45 = por %p43, %p44
      %p46 = scmp.ne.s32.totalorder %s35, %s38
      %p47 = scmp.eq.s32.totalorder %s18, 1
      %p48 = por %p46, %p47
      %p49 = scmp.ne.s32.totalorder %s38, %s39
      %p50 = scmp.eq.s32.totalorder %s18, 0
      %p51 = por %p49, %p50
      %p52 = scmp.ne.s32.totalorder %s38, %s39
      %p53 = scmp.eq.s32.totalorder %s19, 1
      %p54 = por %p52, %p53
      %p56 = scmp.ne.s32.totalorder %s39, %s55
      %p57 = scmp.eq.s32.totalorder %s19, 0
      %p58 = por %p56, %p57
      %s59 = ssub.s32 %s20, %s32
      %s60 = ssub.s32 %s21, %s28
      %s61 = sor.u32 %s59, %s60
      %p62 = scmp.eq.s32.totalorder %s61, 0
      %s64 = sadd.s32 %s63, 1
      %s65 = scalar_select %p62, %s63, %s64
      %p68 = pneg %p62
      %p69 = scmp.eq.s32.totalorder %s13, 1
      %p70 = por %p68, %p69
      %p71 = scmp.ne.s32.totalorder %s63, %s66
      %p72 = scmp.eq.s32.totalorder %s13, 0
      %p73 = por %p71, %p72
      %p74 = scmp.ne.s32.totalorder %s63, %s66
      %p75 = scmp.eq.s32.totalorder %s18, 1
      %p76 = por %p74, %p75
      %p77 = scmp.ne.s32.totalorder %s66, %s67
      %p78 = scmp.eq.s32.totalorder %s18, 0
      %p79 = por %p77, %p78
      %p80 = scmp.ne.s32.totalorder %s66, %s67
      %p81 = scmp.eq.s32.totalorder %s19, 1
      %p82 = por %p80, %p81
      %p84 = scmp.ne.s32.totalorder %s67, %s83
      %p85 = scmp.eq.s32.totalorder %s19, 0
      %p86 = por %p84, %p85
      %p87 = scmp.le.s32.totalorder 1, %s13
      %p88 = scmp.lt.s32.totalorder %s13, 3
      %p89 = pnand %p87, %p88
      %p90 = pneg %p89
      // Predicated region
      $region9: #{tpu_custom_call.1} parent=5 // pred_check
        _
      $region10: #{tpu_custom_call.1} parent=5 // pred_check_branch
        %92 = sbr.rel (%p89) target = $region12
      $region11: #{tpu_custom_call.1} parent=5 // pred_region
        %s93 = ssub.s32 %s13, 1
      $region12: #{tpu_custom_call.1} parent=5 // pred_fallthru
        _
      %p94 = scmp.lt.s32.totalorder %s13, 2
      // Predicated region
      $region13: #{tpu_custom_call.1} parent=5 // pred_check
        %p95 = pneg %p94
      $region14: #{tpu_custom_call.1} parent=5 // pred_check_branch
        %97 = sbr.rel (%p95) target = $region16
      $region15: #{tpu_custom_call.1} parent=5 // pred_region
        // Predicated region
        $region17: #{tpu_custom_call.1} parent=15 // pred_check
          %p98 = pneg %p45
        $region18: #{tpu_custom_call.1} parent=15 // pred_check_branch
          %100 = sbr.rel (%p98) target = $region20
        $region19: #{tpu_custom_call.1} parent=15 // pred_region
          %s101 = sand.u32 %s35, 1
          %s102 = scalar_lea.sflag [#allocation3], %s101
          %s103 = sand.u32 %s35, 1
          %s104 = smul.addr %s103, 8
          %s105 = scalar_lea.vmem [#allocation2], %s104
          %s106 = smul.u32 4, %s20
          %s108 = ssub.s32 128, 128
          %109 = vsyncadd %s102, %s108
          %s110 = smul.addr %s106, 2
          %s111 = smul.addr %s110, 16
          %s112 = scalar_lea.hbm %s0, %s111
          %s113 = sshll.u32 %s105, 4
          %s114 = int_to_ptr.vmem [resolvable:$true] %s113
          %119 = dma.hbm_to_vmem [thread:$0]  %s112, 128, %s114, %s102, 32, 32, 2
        $region20: #{tpu_custom_call.1} parent=15 // pred_fallthru
          _
      $region16: #{tpu_custom_call.1} parent=5 // pred_fallthru
        _
      %p120 = scmp.le.s32.totalorder 1, %s13
      %p121 = scmp.lt.s32.totalorder %s13, 3
      %p122 = pnand %p120, %p121
      %p123 = pneg %p122
      // Predicated region
      $region21: #{tpu_custom_call.1} parent=5 // pred_check
        _
      $region22: #{tpu_custom_call.1} parent=5 // pred_check_branch
        %125 = sbr.rel (%p122) target = $region24
      $region23: #{tpu_custom_call.1} parent=5 // pred_region
        %s126 = ssub.s32 %s13, 1
        %s127 = sand.u32 %s38, 1
        %s128 = scalar_lea.sflag [#allocation3], %s127
        %s129 = sand.u32 %s38, 1
        %s130 = smul.addr %s129, 8
        %s131 = scalar_lea.vmem [#allocation2], %s130
        // Predicated region
        $region25: #{tpu_custom_call.1} parent=23 // pred_check
          %p132 = pneg %p51
        $region26: #{tpu_custom_call.1} parent=23 // pred_check_branch
          %134 = sbr.rel (%p132) target = $region28
        $region27: #{tpu_custom_call.1} parent=23 // pred_region
          %135 = dma.done %s128, 128
        $region28: #{tpu_custom_call.1} parent=23 // pred_fallthru
          _
        %s136 = sand.u32 %s38, 1
        %s137 = scalar_lea.sflag [#allocation3], %s136
        %s138 = sand.u32 %s38, 1
        %s139 = smul.addr %s138, 8
        %s140 = scalar_lea.vmem [#allocation2], %s139
        %p141 = pneg %p51
        %p142 = pneg %p48
        %p143 = pneg %p79
        %p144 = pneg %p76
        %s145 = sand.u32 %s66, 1
        %s146 = scalar_lea.sflag [#allocation4], %s145
        %s147 = sand.u32 %s66, 1
        %s148 = smul.addr %s147, 64
        %s149 = scalar_lea.vmem [#allocation5], %s148
        %s150 = smul.u32 4, %s22
        %s151 = smul.u32 4, %s22
        %v152 = vld [vmem:[%s131] sm:$0x3]
        %v153 = vld [vmem:[%s131 + $0x2] sm:$0x3]
        %v154 = vld [vmem:[%s131 + $0x4] sm:$0x3]
        %v155 = vld [vmem:[%s131 + $0x6] sm:$0x3]
        %v160 = vlaneseq
        %v161 = vshrl.u32 %v160, 7
        %v162 = vsub.s32 0, %v161
        %v163 = vrot.slane %v152, %v162
        %v164 = vlaneseq
        %v165 = vshrl.u32 %v164, 7
        %v166 = vsub.s32 1, %v165
        %v167 = vrot.slane %v152, %v166
        %v168 = vlaneseq
        %v169 = vshrl.u32 %v168, 7
        %v170 = vsub.s32 0, %v169
        %v171 = vrot.slane %v153, %v170
        %v172 = vlaneseq
        %v173 = vshrl.u32 %v172, 7
        %v174 = vsub.s32 1, %v173
        %v175 = vrot.slane %v153, %v174
        %v176 = vlaneseq
        %v177 = vshrl.u32 %v176, 7
        %v178 = vsub.s32 0, %v177
        %v179 = vrot.slane %v154, %v178
        %v180 = vlaneseq
        %v181 = vshrl.u32 %v180, 7
        %v182 = vsub.s32 1, %v181
        %v183 = vrot.slane %v154, %v182
        %v184 = vlaneseq
        %v185 = vshrl.u32 %v184, 7
        %v186 = vsub.s32 0, %v185
        %v187 = vrot.slane %v155, %v186
        %v188 = vlaneseq
        %v189 = vshrl.u32 %v188, 7
        %v190 = vsub.s32 1, %v189
        %v191 = vrot.slane %v155, %v190
        %200 = vst [vmem:[%s149] sm:$0xff] %v163
        %201 = vst [vmem:[%s149 + $0x8] sm:$0xff] %v167
        %202 = vst [vmem:[%s149 + $0x10] sm:$0xff] %v171
        %203 = vst [vmem:[%s149 + $0x18] sm:$0xff] %v175
        %204 = vst [vmem:[%s149 + $0x20] sm:$0xff] %v179
        %205 = vst [vmem:[%s149 + $0x28] sm:$0xff] %v183
        %206 = vst [vmem:[%s149 + $0x30] sm:$0xff] %v187
        %207 = vst [vmem:[%s149 + $0x38] sm:$0xff] %v191
        %s208 = sand.u32 %s66, 1
        %s209 = scalar_lea.sflag [#allocation4], %s208
        %s210 = sand.u32 %s66, 1
        %s211 = smul.addr %s210, 64
        %s212 = scalar_lea.vmem [#allocation5], %s211
        // Predicated region
        $region29: #{tpu_custom_call.1} parent=23 // pred_check
          %p213 = pneg %p76
        $region30: #{tpu_custom_call.1} parent=23 // pred_check_branch
          %215 = sbr.rel (%p213) target = $region32
        $region31: #{tpu_custom_call.1} parent=23 // pred_region
          %s216 = smul.u32 4, %s22
          %s218 = ssub.s32 1024, 1024
          %219 = vsyncadd %s209, %s218
          %s220 = smul.addr %s23, 2
          %s221 = smul.addr %s216, 2
          %s222 = sadd.s32 %s220, %s221
          %s223 = smul.addr %s222, 128
          %s224 = scalar_lea.hbm %s1, %s223
          %s225 = sshll.u32 %s212, 4
          %s226 = int_to_ptr.vmem [resolvable:$true] %s225
          %231 = dma.vmem_to_hbm [thread:$0]  %s226, 1024, %s224, %s209, 256, 256, 16
        $region32: #{tpu_custom_call.1} parent=23 // pred_fallthru
          _
      $region24: #{tpu_custom_call.1} parent=5 // pred_fallthru
        _
      %p232 = scmp.le.s32.totalorder 2, %s13
      // Predicated region
      $region33: #{tpu_custom_call.1} parent=5 // pred_check
        %p233 = pneg %p232
      $region34: #{tpu_custom_call.1} parent=5 // pred_check_branch
        %235 = sbr.rel (%p233) target = $region36
      $region35: #{tpu_custom_call.1} parent=5 // pred_region
        %s236 = ssub.s32 %s13, 2
        // Predicated region
        $region37: #{tpu_custom_call.1} parent=35 // pred_check
          %p237 = pneg %p82
        $region38: #{tpu_custom_call.1} parent=35 // pred_check_branch
          %239 = sbr.rel (%p237) target = $region40
        $region39: #{tpu_custom_call.1} parent=35 // pred_region
          %s240 = sand.u32 %s67, 1
          %s241 = scalar_lea.sflag [#allocation4], %s240
          %s242 = sand.u32 %s67, 1
          %s243 = smul.addr %s242, 64
          %s244 = scalar_lea.vmem [#allocation5], %s243
          %245 = dma.done %s241, 1024
        $region40: #{tpu_custom_call.1} parent=35 // pred_fallthru
          _
      $region36: #{tpu_custom_call.1} parent=5 // pred_fallthru
        _
    $region6: #{tpu_custom_call.1} parent=1 // loop_footer
      %s17 = sadd.s32 1, %s13
    $region7: #{tpu_custom_call.1} parent=1 // loop_footer_branch
      %12 = sbr.rel target = $region3
    $region8: #{tpu_custom_call.1} parent=1 // loop_exit
      _
    %246 = vsyncpa [#allocation3], 1
    %s247 = scalar_lea.sflag [#allocation3], 1
    %248 = vsyncpa %s247, 1
    %249 = vsyncpa [#allocation4], 1
    %s250 = scalar_lea.sflag [#allocation4], 1
    %251 = vsyncpa %s250, 1

</llo_original>
